<compile_context>
chip_gen: v7x
topology: tpu7x:2x2x1
jax: 0.10.0
libtpu: 0.0.40
codegen_flags: <defaults>
</compile_context>

<pallas_src>
import jax
import jax.numpy as jnp
from jax.experimental import pallas as pl
from jax.experimental.pallas import tpu as pltpu


def _round_up(v, m):
    return ((v + m - 1) // m) * m


def _mean_kernel(x_ref, wt_ref, b_ref, o_ref):
    # In-kernel cast to the compute dtype (bf16 or f32) — rides the VPU slot under
    # the DMA instead of a separate wrapper-side XLA pass over x.
    x = x_ref[...].astype(wt_ref.dtype)
    acc = jnp.dot(x, wt_ref[...], preferred_element_type=jnp.float32)
    o_ref[...] = (acc + b_ref[...]).astype(o_ref.dtype)


def prepare_diag_gaussian_params(weight, bias, logstd, compute_dtype=jnp.bfloat16):
    """One-time parameter preparation (transpose + cast; no padding needed).

    Args:
      weight: [num_outputs, num_inputs]  (PyTorch Linear layout)
      bias:   [num_outputs]
      logstd: [num_outputs]
      compute_dtype: MXU input dtype for x/W (bf16 default; accumulation is f32).
    """
    wt = jnp.asarray(weight).T.astype(compute_dtype)            # [d_in, d_out]
    b2 = jnp.asarray(bias).reshape(1, -1).astype(jnp.float32)   # [1, d_out]
    return {"wt": wt, "b": b2, "logstd": jnp.asarray(logstd).astype(jnp.float32)}


def _choose_batch_tile(B, d_in, d_out, compute_itemsize, budget_bytes=12 << 20):
    """Batch tile: as big as the VMEM budget allows; >=2 grid steps for large B
    (so the "parallel" axis spans both v7x TensorCores); a single full-extent
    block for small B (no masking, no per-step overhead)."""
    sub = 16 if compute_itemsize < 4 else 8          # bf16 packs 2 rows per sublane
    lanes_in = _round_up(max(d_in, 1), 128)
    lanes_out = _round_up(max(d_out, 1), 128)
    # Resident (constant index_map) W^T + bias, double-buffered by the pipeline.
    resident = 2 * (_round_up(d_in, 8) * lanes_out * compute_itemsize
                    + 8 * lanes_out * 4)
    avail = max(budget_bytes - resident, 1 << 20)
    # Per batch row: double-buffered f32 x tile + double-buffered f32 output tile.
    bytes_per_row = 2 * lanes_in * 4 + 2 * lanes_out * 4
    tb = max(sub, (avail // bytes_per_row) // sub * sub)
    tb = min(tb, 8192)
    if B <= tb:
        if B >= 512:
            # Enough work to split: guarantee >= 2 grid steps (v7x megacore).
            tb = _round_up(pl.cdiv(B, 2), sub)
        else:
            tb = B   # single step, block == full extent
    return tb


@jax.jit
def diag_gaussian_forward(x, params):
    """Forward pass: returns (action_mean, action_std), each [B, num_outputs]."""
    wt, b2, logstd = params["wt"], params["b"], params["logstd"]
    B, d_in = x.shape
    d_in_w, d_out = wt.shape
    assert d_in == d_in_w, "x feature dim does not match weight"
    itemsize = jnp.dtype(wt.dtype).itemsize

    tb = _choose_batch_tile(B, d_in, d_out, itemsize)
    n_tiles = pl.cdiv(B, tb)

    # Explicit VMEM limit (v5e's scoped default is 16 MiB; v6e/v7x default 32 MiB).
    lanes_in = _round_up(d_in, 128)
    lanes_out = _round_up(d_out, 128)
    vmem_need = (2 * _round_up(tb, 8) * lanes_in * x.dtype.itemsize   # x tiles
                 + 2 * _round_up(tb, 8) * lanes_out * 4               # out tiles
                 + 2 * _round_up(d_in, 8) * lanes_out * itemsize      # resident W^T
                 + 2 * 8 * lanes_out * 4)                             # resident bias
    vmem_limit = int(min(max(2 * vmem_need, 32 << 20), 48 << 20))

    cost = pl.CostEstimate(
        flops=2 * B * d_in * d_out,
        transcendentals=0,
        bytes_accessed=(B * d_in * x.dtype.itemsize      # x read (cast in-kernel)
                        + d_in * d_out * itemsize        # W^T (resident)
                        + d_out * 4                      # bias
                        + B * d_out * 4))                # mean writeback (unpadded)

    mean = pl.pallas_call(
        _mean_kernel,
        out_shape=jax.ShapeDtypeStruct((B, d_out), jnp.float32),
        grid_spec=pltpu.PrefetchScalarGridSpec(
            num_scalar_prefetch=0,
            grid=(n_tiles,),
            in_specs=[
                pl.BlockSpec((tb, d_in), lambda i: (i, 0)),      # x batch tile
                pl.BlockSpec((d_in, d_out), lambda i: (0, 0)),   # W^T (resident)
                pl.BlockSpec((1, d_out), lambda i: (0, 0)),      # bias (resident)
            ],
            out_specs=pl.BlockSpec((tb, d_out), lambda i: (i, 0)),
        ),
        compiler_params=pltpu.CompilerParams(
            dimension_semantics=("parallel",),
            vmem_limit_bytes=vmem_limit),
        cost_estimate=cost,
    )(x, wt, b2)

    # std = exp(logstd) broadcast to mean's shape (FixedNormal scale) — d_out scalars,
    # computed once in the wrapper, never written by the kernel.
    std = jnp.broadcast_to(jnp.exp(logstd), mean.shape)
    return mean, std


def orthogonal_init(key, rows, cols, gain):
    """Deterministic orthogonal init (mirrors nn.init.orthogonal_)."""
    big = max(rows, cols)
    a = jax.random.normal(key, (big, big), dtype=jnp.float32)
    q, r = jnp.linalg.qr(a)
    d = jnp.diag(r)
    q = q * jnp.where(d == 0, 1.0, jnp.sign(d))[None, :]
    return gain * q[:rows, :cols]


if __name__ == "__main__":
    key = jax.random.PRNGKey(0)
    k_x, k_w, k_x2 = jax.random.split(key, 3)

    B, num_inputs, num_outputs = 8, 32, 8

    # DiagGaussian.__init__: orthogonal weight (gain=0.01), zero bias, zero logstd.
    weight = orthogonal_init(k_w, num_outputs, num_inputs, gain=0.01)  # [d_out, d_in]
    bias = jnp.zeros((num_outputs,), dtype=jnp.float32)
    logstd = jnp.zeros((num_outputs,), dtype=jnp.float32)

    x = jax.random.normal(k_x, (B, num_inputs), dtype=jnp.float32)

    # High-precision JAX reference.
    ref_mean = jnp.dot(x, weight.T, precision=jax.lax.Precision.HIGHEST) + bias
    ref_std = jnp.broadcast_to(jnp.exp(logstd), ref_mean.shape)

    # f32 MXU path (strict check).
    params_f32 = prepare_diag_gaussian_params(weight, bias, logstd,
                                              compute_dtype=jnp.float32)
    mean, std = diag_gaussian_forward(x, params_f32)
    jax.block_until_ready((mean, std))
    assert mean.shape == (B, num_outputs) and std.shape == (B, num_outputs)
    assert jnp.allclose(mean, ref_mean, atol=1e-5), "f32 mean mismatch"
    assert jnp.allclose(std, ref_std, atol=1e-6), "f32 std mismatch"

    # Default bf16 matmul path (f32 accumulation) — looser tolerance.
    params_bf16 = prepare_diag_gaussian_params(weight, bias, logstd)
    mean_bf, std_bf = diag_gaussian_forward(x, params_bf16)
    jax.block_until_ready((mean_bf, std_bf))
    assert jnp.allclose(mean_bf, ref_mean, atol=5e-3), "bf16 mean mismatch"
    assert jnp.allclose(std_bf, ref_std, atol=1e-6), "bf16 std mismatch"

    # Larger ragged batch: exercises the tiled path (2 grid steps, masked edge block).
    B2 = 777
    x2 = jax.random.normal(k_x2, (B2, num_inputs), dtype=jnp.float32)
    ref2 = jnp.dot(x2, weight.T, precision=jax.lax.Precision.HIGHEST) + bias
    mean2, std2 = diag_gaussian_forward(x2, params_f32)
    jax.block_until_ready((mean2, std2))
    assert mean2.shape == (B2, num_outputs) and std2.shape == (B2, num_outputs)
    assert jnp.allclose(mean2, ref2, atol=1e-5), "ragged-batch mean mismatch"

    print("KERNEL_OK")
</pallas_src>

<mosaic_0001>
module attributes {stable_mosaic.version = 11 : i64} {
  func.func @_mean_kernel(%arg0: i32, %arg1: memref<8x32xf32, #tpu.memory_space<vmem>>, %arg2: memref<32x8xf32, #tpu.memory_space<vmem>>, %arg3: memref<1x8xf32, #tpu.memory_space<vmem>>, %arg4: memref<8x8xf32, #tpu.memory_space<vmem>>) attributes {dimension_semantics = [#tpu.dimension_semantics<parallel>], iteration_bounds = array<i64: 1>, scalar_prefetch = 0 : i64, scratch_operands = 0 : i64, tpu.core_type = #tpu.core_type<tc>, window_params = [{transform_indices = @transform_0, window_bounds = array<i64: 8, 32>}, {pipeline_mode = #tpu.pipeline_mode<synchronous>, transform_indices = @transform_1, window_bounds = array<i64: 32, 8>}, {pipeline_mode = #tpu.pipeline_mode<synchronous>, transform_indices = @transform_2, window_bounds = array<i64: 1, 8>}, {transform_indices = @transform_3, window_bounds = array<i64: 8, 8>}]} {
    %c0 = arith.constant 0 : index
    %c0_0 = arith.constant 0 : index
    %0 = vector.load %arg1[%c0, %c0_0] : memref<8x32xf32, #tpu.memory_space<vmem>>, vector<8x32xf32>
    %c0_1 = arith.constant 0 : index
    %c0_2 = arith.constant 0 : index
    %1 = vector.load %arg2[%c0_1, %c0_2] : memref<32x8xf32, #tpu.memory_space<vmem>>, vector<32x8xf32>
    %cst = arith.constant dense<0.000000e+00> : vector<8x8xf32>
    %2 = tpu.matmul %0, %1, %cst {dimension_numbers = #tpu.dot_dimension_numbers<[1], [0], [0], [1], [0, 0, 1, 1], [], []>} : vector<8x32xf32>, vector<32x8xf32>, vector<8x8xf32> -> vector<8x8xf32>
    %c0_3 = arith.constant 0 : index
    %c0_4 = arith.constant 0 : index
    %3 = vector.load %arg3[%c0_3, %c0_4] : memref<1x8xf32, #tpu.memory_space<vmem>>, vector<1x8xf32>
    %4 = vector.broadcast %3 : vector<1x8xf32> to vector<8x8xf32>
    %5 = arith.addf %2, %4 : vector<8x8xf32>
    %c0_5 = arith.constant 0 : index
    %c0_6 = arith.constant 0 : index
    %6 = vector.load %arg4[%c0_5, %c0_6] : memref<8x8xf32, #tpu.memory_space<vmem>>, vector<8x8xf32>
    tpu.vector_store %arg4[%c0_5, %c0_6], %5 {strides = array<i32>} : memref<8x8xf32, #tpu.memory_space<vmem>>, vector<8x8xf32>,
    return
  }
  func.func @transform_0(%arg0: i32) -> (i32, i32) {
    %c0_i32 = arith.constant 0 : i32
    %c0_i32_0 = arith.constant 0 : i32
    return %arg0, %c0_i32 : i32, i32
  }
  func.func @transform_1(%arg0: i32) -> (i32, i32) {
    %c0_i32 = arith.constant 0 : i32
    %c0_i32_0 = arith.constant 0 : i32
    %c0_i32_1 = arith.constant 0 : i32
    return %c0_i32, %c0_i32_0 : i32, i32
  }
  func.func @transform_2(%arg0: i32) -> (i32, i32) {
    %c0_i32 = arith.constant 0 : i32
    %c0_i32_0 = arith.constant 0 : i32
    %c0_i32_1 = arith.constant 0 : i32
    return %c0_i32, %c0_i32_0 : i32, i32
  }
  func.func @transform_3(%arg0: i32) -> (i32, i32) {
    %c0_i32 = arith.constant 0 : i32
    %c0_i32_0 = arith.constant 0 : i32
    return %arg0, %c0_i32 : i32, i32
  }
}

</mosaic_0001>

<llo_original>
// kernel: diag_gaussian_forward.1
$region0: #{diag_gaussian_forward.1}
  #allocation0 [shape = 'u32[]', space=smem, size = 0x4, offset = 0x4, fixed_abs, tag = 'smem constant byte address 0x4 - core index']
  #allocation1 [shape = 'u32[144,128]{1,0:T(1,128)}', space=vmem, size = 0x12000, scoped, tag = 'internal scratch']
  %s0 = inlined_call_operand.vmem [shape: f32[8,32], index: 0, kind: input, shape index: {}]
  %s1 = inlined_call_operand.vmem [shape: f32[32,8], index: 1, kind: input, shape index: {}]
  %s2 = inlined_call_operand.vmem [shape: f32[1,8], index: 2, kind: input, shape index: {}]
  %s3 = inlined_call_operand.hbm [shape: f32[8,8], index: 3, kind: output, shape index: {}]
  %s4 = sld [smem:[#allocation0]]
  $region22: #{diag_gaussian_forward.1} parent=0
    _
  %s6 = ssub.s32 1, %s4
  %s7 = scalar_select 0, %s6, %s4
  $region1: #{diag_gaussian_forward.1} parent=0
    #allocation2 [shape = 'u8[4096]{0}', space=vmem, size = 0x1000, scoped, tag = 'output window, operand 0, single buffered']
    #allocation3 [shape = 's32[1]{0}', space=sflag, size = 0x4, scoped, tag = 'scoped memory for diag_gaussian_forward.1']
    %8 = vsyncpa [#allocation3], 0
    // Predicated region
    $region2: #{diag_gaussian_forward.1} parent=1 // pred_check
      _
    $region3: #{diag_gaussian_forward.1} parent=1 // pred_check_branch
      %10 = sbr.rel (0) target = $region5
    $region4: #{diag_gaussian_forward.1} parent=1 // pred_region
      _
    $region5: #{diag_gaussian_forward.1} parent=1 // pred_fallthru
      _
    // Predicated region
    $region6: #{diag_gaussian_forward.1} parent=1 // pred_check
      _
    $region7: #{diag_gaussian_forward.1} parent=1 // pred_check_branch
      %12 = sbr.rel (0) target = $region9
    $region8: #{diag_gaussian_forward.1} parent=1 // pred_region
      _
    $region9: #{diag_gaussian_forward.1} parent=1 // pred_fallthru
      _
    // Predicated region
    $region10: #{diag_gaussian_forward.1} parent=1 // pred_check
      _
    $region11: #{diag_gaussian_forward.1} parent=1 // pred_check_branch
      %14 = sbr.rel (0) target = $region13
    $region12: #{diag_gaussian_forward.1} parent=1 // pred_region
      _
    $region13: #{diag_gaussian_forward.1} parent=1 // pred_fallthru
      _
    %v15 = vld [vmem:[%s0] sm:$0xff]
    %v16 = vld [vmem:[%s1] sm:$0xff]
    %v17 = vld [vmem:[%s1 + $0x8] sm:$0xff]
    %v18 = vld [vmem:[%s1 + $0x10] sm:$0xff]
    %v19 = vld [vmem:[%s1 + $0x18] sm:$0xff]
    %v20 = vld [vmem:[%s2] sm:$0x1]
    %v22 = vlaneseq
    %v23 = vshrl.u32 %v22, 7
    %v24 = vsub.s32 0, %v23
    %v25 = vrot.slane %v20, %v24
    %vm27 = vcmask 261120
    %v29 = vsel %vm27, %v15, 0
    %31 = vmatprep.subr.mxu0 0.0
    %32 = vmatpush1.msra.mxu0 %v16
    %33 = vmatprep.subr.mxu0 0.0
    %34 = vmatpush1.msra.mxu0 %v17
    %35 = vmatprep.subr.mxu0 0.0
    %36 = vmatpush1.msra.mxu0 %v18
    %37 = vmatprep.subr.mxu0 0.0
    %38 = vmatpush1.msra.mxu0 %v19
    %39 = vmatprep.subr.mxu0 0.0
    %40 = vmatpush1.msra.mxu0 0.0
    %41 = vmatprep.subr.mxu0 0.0
    %42 = vmatpush1.msra.mxu0 0.0
    %43 = vmatprep.subr.mxu0 0.0
    %44 = vmatpush1.msra.mxu0 0.0
    %45 = vmatprep.subr.mxu0 0.0
    %46 = vmatpush1.msra.mxu0 0.0
    %47 = vmatprep.subr.mxu0 0.0
    %48 = vmatpush1.msra.mxu0 0.0
    %49 = vmatprep.subr.mxu0 0.0
    %50 = vmatpush1.msra.mxu0 0.0
    %51 = vmatprep.subr.mxu0 0.0
    %52 = vmatpush1.msra.mxu0 0.0
    %53 = vmatprep.subr.mxu0 0.0
    %54 = vmatpush1.msra.mxu0 0.0
    %55 = vmatprep.subr.mxu0 0.0
    %56 = vmatpush1.msra.mxu0 0.0
    %57 = vmatprep.subr.mxu0 0.0
    %58 = vmatpush1.msra.mxu0 0.0
    %59 = vmatprep.subr.mxu0 0.0
    %60 = vmatpush1.msra.mxu0 0.0
    %61 = vmatprep.subr.mxu0 0.0
    %62 = vmatpush1.msra.mxu0 0.0
    %63 = vmatprep.subr.mxu0 0.0
    %64 = vmatpush1.msra.mxu0 0.0
    %65 = vmatprep.subr.mxu0 0.0
    %66 = vmatpush1.msra.mxu0 0.0
    %67 = vmatprep.subr.mxu0 0.0
    %68 = vmatpush1.msra.mxu0 0.0
    %69 = vmatprep.subr.mxu0 0.0
    %70 = vmatpush1.msra.mxu0 0.0
    %71 = vmatprep.subr.mxu0 0.0
    %72 = vmatpush1.msra.mxu0 0.0
    %73 = vmatprep.subr.mxu0 0.0
    %74 = vmatpush1.msra.mxu0 0.0
    %75 = vmatprep.subr.mxu0 0.0
    %76 = vmatpush1.msra.mxu0 0.0
    %77 = vmatprep.subr.mxu0 0.0
    %78 = vmatpush1.msra.mxu0 0.0
    %79 = vmatprep.subr.mxu0 0.0
    %80 = vmatpush1.msra.mxu0 0.0
    %81 = vmatprep.subr.mxu0 0.0
    %82 = vmatpush1.msra.mxu0 0.0
    %83 = vmatprep.subr.mxu0 0.0
    %84 = vmatpush1.msra.mxu0 0.0
    %85 = vmatprep.subr.mxu0 0.0
    %86 = vmatpush1.msra.mxu0 0.0
    %87 = vmatprep.subr.mxu0 0.0
    %88 = vmatpush1.msra.mxu0 0.0
    %89 = vmatprep.subr.mxu0 0.0
    %90 = vmatpush1.msra.mxu0 0.0
    %91 = vmatprep.subr.mxu0 0.0
    %92 = vmatpush1.msra.mxu0 0.0
    %93 = vmatprep.subr.mxu0 0.0
    %94 = vmatpush1.msra.mxu0 0.0
    %95 = vmatprep.mubr.f32.mxu0 0.0
    %96 = vmatmul.mubr.f32.gmra.mrb[0].mxu0 %v29
    %v97 = vpop.f32.mrb[0].mxu0
    %v98 = vadd.f32 %v25, %v97
    %v99 = vpop.f32.mrb[0].mxu0
    %100 = vdwg.mxu0
    %vm101 = vcmask 64512
    %102 = vst.msk [vmem:[#allocation2] sm:$0xff] %vm101, %v98
    // Predicated region
    $region14: #{diag_gaussian_forward.1} parent=1 // pred_check
      _
    $region15: #{diag_gaussian_forward.1} parent=1 // pred_check_branch
      %104 = sbr.rel (0) target = $region17
    $region16: #{diag_gaussian_forward.1} parent=1 // pred_region
      %s106 = ssub.s32 128, 128
      %107 = vsyncadd [#allocation3], %s106
      %s109 = sshll.u32 [#allocation2], 4
      %s110 = int_to_ptr.vmem [resolvable:$true] %s109
      %112 = dma.vmem_to_hbm [thread:$0]  %s110, 128, %s3, [#allocation3]
    $region17: #{diag_gaussian_forward.1} parent=1 // pred_fallthru
      _
    // Predicated region
    $region18: #{diag_gaussian_forward.1} parent=1 // pred_check
      _
    $region19: #{diag_gaussian_forward.1} parent=1 // pred_check_branch
      %114 = sbr.rel (0) target = $region21
    $region20: #{diag_gaussian_forward.1} parent=1 // pred_region
      %115 = dma.done [#allocation3], 128
    $region21: #{diag_gaussian_forward.1} parent=1 // pred_fallthru
      _
    %116 = vsyncpa [#allocation3], 1

</llo_original>
